<compile_context>
chip_gen: v5e
topology: v5e:2x2
jax: 0.10.0
libtpu: 0.0.40
codegen_flags: <defaults>
</compile_context>

<pallas_src>
import functools

import jax
import jax.numpy as jnp
from jax import lax
from jax.experimental import pallas as pl
from jax.experimental.pallas import tpu as pltpu


# ------------------------------------------------------------------ kernel

def _withbias_layernorm_kernel(x_ref, g_ref, b_ref, o_ref, *, eps):
    """LayerNorm over the last axis for a (rows, C) tile."""
    x = x_ref[...].astype(jnp.float32)                      # (rows, C)
    mu = jnp.mean(x, axis=-1, keepdims=True)                # (rows, 1)
    xc = x - mu
    var = jnp.mean(xc * xc, axis=-1, keepdims=True)         # biased (unbiased=False)
    y = xc * lax.rsqrt(var + eps)                           # rsqrt -> EUP slot
    o_ref[...] = (y * g_ref[...] + b_ref[...]).astype(o_ref.dtype)


# ------------------------------------------------------------------ wrapper

def withbias_layernorm(x, weight, bias, *, eps=1e-5, block_rows=256):
    """out = WithBias_LayerNorm(x); normalization over the last axis of `x`."""
    orig_shape = x.shape
    C = orig_shape[-1]
    assert weight.shape == (C,) and bias.shape == (C,)

    x2 = x.reshape(-1, C)                                   # flatten leading dims
    N = x2.shape[0]

    # Row tile: sublane-aligned (multiple of 8) and as large as reasonable; if the
    # whole problem is smaller than one tile, take it in a single block.
    if N <= block_rows:
        rows = N
    else:
        rows = max(8, block_rows - block_rows % 8)
    grid = (pl.cdiv(N, rows),)                              # partial tail is masked

    out2 = pl.pallas_call(
        functools.partial(_withbias_layernorm_kernel, eps=eps),
        out_shape=jax.ShapeDtypeStruct((N, C), x.dtype),
        grid=grid,
        in_specs=[
            pl.BlockSpec((rows, C), lambda i: (i, 0)),      # activation tile
            pl.BlockSpec((1, C), lambda i: (0, 0)),         # gamma (resident)
            pl.BlockSpec((1, C), lambda i: (0, 0)),         # beta  (resident)
        ],
        out_specs=pl.BlockSpec((rows, C), lambda i: (i, 0)),
        compiler_params=pltpu.CompilerParams(
            dimension_semantics=("parallel",)),             # rows are independent
    )(x2, weight.reshape(1, C), bias.reshape(1, C))

    return out2.reshape(orig_shape)


# ------------------------------------------------------------------ reference

def _reference_layernorm(x, weight, bias, eps=1e-5):
    mu = x.mean(-1, keepdims=True)
    var = jnp.mean((x - mu) ** 2, axis=-1, keepdims=True)
    return (x - mu) / jnp.sqrt(var + eps) * weight + bias


# ------------------------------------------------------------------ main

if __name__ == "__main__":
    key = jax.random.PRNGKey(0)
    k1, k2, k3, k4, k5, k6 = jax.random.split(key, 6)

    # Case 1: lane-dense channels (C multiple of 128), tokens layout (B, T, C).
    B, T, C = 2, 512, 128
    x = jax.random.normal(k1, (B, T, C), jnp.float32)
    w = 1.0 + 0.1 * jax.random.normal(k2, (C,), jnp.float32)
    b = 0.05 * jax.random.normal(k3, (C,), jnp.float32)

    out = jax.block_until_ready(withbias_layernorm(x, w, b))
    ref = _reference_layernorm(x, w, b)
    assert out.shape == x.shape
    err = float(jnp.max(jnp.abs(out - ref)))
    assert err < 1e-3, f"case 1 max abs error too large: {err}"

    # Case 2: NHWC-style input with a channel count that is NOT a multiple of 128
    # (block covers the full channel extent, so it still lowers cleanly).
    B2, H2, W2, C2 = 2, 16, 16, 48
    x2 = jax.random.normal(k4, (B2, H2, W2, C2), jnp.float32)
    w2 = 1.0 + 0.1 * jax.random.normal(k5, (C2,), jnp.float32)
    b2 = 0.05 * jax.random.normal(k6, (C2,), jnp.float32)

    out2 = jax.block_until_ready(withbias_layernorm(x2, w2, b2))
    ref2 = _reference_layernorm(x2, w2, b2)
    assert out2.shape == x2.shape
    err2 = float(jnp.max(jnp.abs(out2 - ref2)))
    assert err2 < 1e-3, f"case 2 max abs error too large: {err2}"

    print("KERNEL_OK")
</pallas_src>

<mosaic_0001>
module attributes {stable_mosaic.version = 11 : i64} {
  func.func @_withbias_layernorm_kernel(%arg0: i32, %arg1: memref<256x128xf32, #tpu.memory_space<vmem>>, %arg2: memref<1x128xf32, #tpu.memory_space<vmem>>, %arg3: memref<1x128xf32, #tpu.memory_space<vmem>>, %arg4: memref<256x128xf32, #tpu.memory_space<vmem>>) attributes {dimension_semantics = [#tpu.dimension_semantics<parallel>], iteration_bounds = array<i64: 4>, scalar_prefetch = 0 : i64, scratch_operands = 0 : i64, tpu.core_type = #tpu.core_type<tc>, window_params = [{transform_indices = @transform_0, window_bounds = array<i64: 256, 128>}, {pipeline_mode = #tpu.pipeline_mode<synchronous>, transform_indices = @transform_1, window_bounds = array<i64: 1, 128>}, {pipeline_mode = #tpu.pipeline_mode<synchronous>, transform_indices = @transform_2, window_bounds = array<i64: 1, 128>}, {transform_indices = @transform_3, window_bounds = array<i64: 256, 128>}]} {
    %c0 = arith.constant 0 : index
    %c0_0 = arith.constant 0 : index
    %0 = vector.load %arg1[%c0, %c0_0] : memref<256x128xf32, #tpu.memory_space<vmem>>, vector<256x128xf32>
    %cst = arith.constant dense<0.000000e+00> : vector<256xf32>
    %1 = vector.multi_reduction <add>, %0, %cst [1] : vector<256x128xf32> to vector<256xf32>
    %2 = vector.shape_cast %1 : vector<256xf32> to vector<256x1xf32>
    %cst_1 = arith.constant 1.280000e+02 : f32
    %3 = vector.broadcast %cst_1 : f32 to vector<256x1xf32>
    %4 = arith.divf %2, %3 : vector<256x1xf32>
    %5 = vector.broadcast %4 : vector<256x1xf32> to vector<256x128xf32>
    %6 = arith.subf %0, %5 : vector<256x128xf32>
    %7 = arith.mulf %6, %6 : vector<256x128xf32>
    %cst_2 = arith.constant dense<0.000000e+00> : vector<256xf32>
    %8 = vector.multi_reduction <add>, %7, %cst_2 [1] : vector<256x128xf32> to vector<256xf32>
    %9 = vector.shape_cast %8 : vector<256xf32> to vector<256x1xf32>
    %cst_3 = arith.constant 1.280000e+02 : f32
    %10 = vector.broadcast %cst_3 : f32 to vector<256x1xf32>
    %11 = arith.divf %9, %10 : vector<256x1xf32>
    %cst_4 = arith.constant 9.99999974E-6 : f32
    %12 = vector.broadcast %cst_4 : f32 to vector<256x1xf32>
    %13 = arith.addf %11, %12 : vector<256x1xf32>
    %14 = math.rsqrt %13 : vector<256x1xf32>
    %15 = vector.broadcast %14 : vector<256x1xf32> to vector<256x128xf32>
    %16 = arith.mulf %6, %15 : vector<256x128xf32>
    %c0_5 = arith.constant 0 : index
    %c0_6 = arith.constant 0 : index
    %17 = vector.load %arg2[%c0_5, %c0_6] : memref<1x128xf32, #tpu.memory_space<vmem>>, vector<1x128xf32>
    %18 = vector.broadcast %17 : vector<1x128xf32> to vector<256x128xf32>
    %19 = arith.mulf %16, %18 : vector<256x128xf32>
    %c0_7 = arith.constant 0 : index
    %c0_8 = arith.constant 0 : index
    %20 = vector.load %arg3[%c0_7, %c0_8] : memref<1x128xf32, #tpu.memory_space<vmem>>, vector<1x128xf32>
    %21 = vector.broadcast %20 : vector<1x128xf32> to vector<256x128xf32>
    %22 = arith.addf %19, %21 : vector<256x128xf32>
    %c0_9 = arith.constant 0 : index
    %c0_10 = arith.constant 0 : index
    %23 = vector.load %arg4[%c0_9, %c0_10] : memref<256x128xf32, #tpu.memory_space<vmem>>, vector<256x128xf32>
    tpu.vector_store %arg4[%c0_9, %c0_10], %22 {strides = array<i32>} : memref<256x128xf32, #tpu.memory_space<vmem>>, vector<256x128xf32>,
    return
  }
  func.func @transform_0(%arg0: i32) -> (i32, i32) {
    %c0_i32 = arith.constant 0 : i32
    %c0_i32_0 = arith.constant 0 : i32
    return %arg0, %c0_i32 : i32, i32
  }
  func.func @transform_1(%arg0: i32) -> (i32, i32) {
    %c0_i32 = arith.constant 0 : i32
    %c0_i32_0 = arith.constant 0 : i32
    %c0_i32_1 = arith.constant 0 : i32
    return %c0_i32, %c0_i32_0 : i32, i32
  }
  func.func @transform_2(%arg0: i32) -> (i32, i32) {
    %c0_i32 = arith.constant 0 : i32
    %c0_i32_0 = arith.constant 0 : i32
    %c0_i32_1 = arith.constant 0 : i32
    return %c0_i32, %c0_i32_0 : i32, i32
  }
  func.func @transform_3(%arg0: i32) -> (i32, i32) {
    %c0_i32 = arith.constant 0 : i32
    %c0_i32_0 = arith.constant 0 : i32
    return %arg0, %c0_i32 : i32, i32
  }
}

</mosaic_0001>

<llo_original>
// kernel: tpu_custom_call.1
$region0: #{tpu_custom_call.1}
  #allocation0 [shape = 'u32[]', space=smem, size = 0x4, offset = 0x4, fixed_abs, tag = 'smem constant byte address 0x4 - core index']
  #allocation1 [shape = 'u32[72,128]{1,0:T(1,128)}', space=vmem, size = 0x9000, scoped, tag = 'internal scratch']
  %s0 = inlined_call_operand.hbm [shape: f32[1024,128], index: 0, kind: input, shape index: {}]
  %s1 = inlined_call_operand.hbm [shape: f32[1,128], index: 1, kind: input, shape index: {}]
  %s2 = inlined_call_operand.vmem [shape: f32[1,128], index: 2, kind: input, shape index: {}]
  %s3 = inlined_call_operand.hbm [shape: f32[1024,128], index: 3, kind: output, shape index: {}]
  %s4 = sld [smem:[#allocation0]]
  $region53: #{tpu_custom_call.1} parent=0
    _
  %s6 = ssub.s32 1, %s4
  %s7 = scalar_select 0, %s6, %s4
  $region1: #{tpu_custom_call.1} parent=0
    #allocation2 [shape = 'u8[262144]{0}', space=vmem, size = 0x40000, scoped, tag = 'input window, operand 0']
    #allocation3 [shape = 's32[2]{0}', space=sflag, size = 0x8, scoped, tag = 'scoped memory for tpu_custom_call.1']
    #allocation4 [shape = 's32[2]{0}', space=sflag, size = 0x8, scoped, tag = 'scoped memory for tpu_custom_call.1']
    #allocation5 [shape = 'u8[512]{0}', space=vmem, size = 0x400, scoped, tag = 'input window, operand 1, single buffered']
    #allocation6 [shape = 's32[1]{0}', space=sflag, size = 0x4, scoped, tag = 'scoped memory for tpu_custom_call.1']
    #allocation7 [shape = 'u8[262144]{0}', space=vmem, size = 0x40000, scoped, tag = 'output window, operand 0']
    %8 = vsyncpa [#allocation3], 0
    %s9 = scalar_lea.sflag [#allocation3], 1
    %10 = vsyncpa %s9, 0
    %11 = vsyncpa [#allocation6], 0
    %12 = vsyncpa [#allocation4], 0
    %s13 = scalar_lea.sflag [#allocation4], 1
    %14 = vsyncpa %s13, 0
    loop: start=0, step=1, limit=6
    $region2: #{tpu_custom_call.1} parent=1 // loop_pre_header
      _
    $region3: #{tpu_custom_call.1} parent=1 // loop_header
      %s16 = sphi 0, %s20
      %p17 = scmp.ge.s32.totalorder %s16, 6
      %s26 = sphi 0, %s28
      %s29 = sphi 0, %s26
      %s30 = sphi 0, %s29
      %s46 = sphi 0, %s30
      %s50 = sphi 0, %s50
      %s52 = sphi 0, %s50
      %s53 = sphi 0, %s52
      %s67 = sphi 0, %s53
      %s71 = sphi 0, %s71
      %s73 = sphi 0, %s71
      %s74 = sphi 0, %s73
      %s88 = sphi 0, %s74
      %s94 = sphi 0, %s96
      %s97 = sphi 0, %s94
      %s98 = sphi 0, %s97
      %s114 = sphi 0, %s98
    $region4: #{tpu_custom_call.1} parent=1 // loop_header_branch
      %19 = sbr.rel (%p17) target = $region8
    $region5: #{tpu_custom_call.1} parent=1 // loop_body
      %s21 = ssub.s32 %s16, 1
      %s22 = ssub.s32 %s16, 2
      %s23 = sadd.s32 %s16, 1
      %s24 = ssub.s32 %s16, %s23
      %p25 = scmp.eq.s32.totalorder %s24, 0
      %s27 = sadd.s32 %s26, 1
      %s28 = scalar_select %p25, %s26, %s27
      %p31 = pneg %p25
      %p32 = scmp.eq.s32.totalorder %s16, 3
      %p33 = por %p31, %p32
      %p34 = scmp.ne.s32.totalorder %s26, %s29
      %p35 = scmp.eq.s32.totalorder %s16, 0
      %p36 = por %p34, %p35
      %p37 = scmp.ne.s32.totalorder %s26, %s29
      %p38 = scmp.eq.s32.totalorder %s21, 3
      %p39 = por %p37, %p38
      %p40 = scmp.ne.s32.totalorder %s29, %s30
      %p41 = scmp.eq.s32.totalorder %s21, 0
      %p42 = por %p40, %p41
      %p43 = scmp.ne.s32.totalorder %s29, %s30
      %p44 = scmp.eq.s32.totalorder %s22, 3
      %p45 = por %p43, %p44
      %p47 = scmp.ne.s32.totalorder %s30, %s46
      %p48 = scmp.eq.s32.totalorder %s22, 0
      %p49 = por %p47, %p48
      %s51 = sadd.s32 %s50, 1
      %p54 = scmp.eq.s32.totalorder %s16, 3
      %p55 = scmp.ne.s32.totalorder %s50, %s52
      %p56 = scmp.eq.s32.totalorder %s16, 0
      %p57 = por %p55, %p56
      %p58 = scmp.ne.s32.totalorder %s50, %s52
      %p59 = scmp.eq.s32.totalorder %s21, 3
      %p60 = por %p58, %p59
      %p61 = scmp.ne.s32.totalorder %s52, %s53
      %p62 = scmp.eq.s32.totalorder %s21, 0
      %p63 = por %p61, %p62
      %p64 = scmp.ne.s32.totalorder %s52, %s53
      %p65 = scmp.eq.s32.totalorder %s22, 3
      %p66 = por %p64, %p65
      %p68 = scmp.ne.s32.totalorder %s53, %s67
      %p69 = scmp.eq.s32.totalorder %s22, 0
      %p70 = por %p68, %p69
      %s72 = sadd.s32 %s71, 1
      %p75 = scmp.eq.s32.totalorder %s16, 3
      %p76 = scmp.ne.s32.totalorder %s71, %s73
      %p77 = scmp.eq.s32.totalorder %s16, 0
      %p78 = por %p76, %p77
      %p79 = scmp.ne.s32.totalorder %s71, %s73
      %p80 = scmp.eq.s32.totalorder %s21, 3
      %p81 = por %p79, %p80
      %p82 = scmp.ne.s32.totalorder %s73, %s74
      %p83 = scmp.eq.s32.totalorder %s21, 0
      %p84 = por %p82, %p83
      %p85 = scmp.ne.s32.totalorder %s73, %s74
      %p86 = scmp.eq.s32.totalorder %s22, 3
      %p87 = por %p85, %p86
      %p89 = scmp.ne.s32.totalorder %s74, %s88
      %p90 = scmp.eq.s32.totalorder %s22, 0
      %p91 = por %p89, %p90
      %s92 = ssub.s32 %s16, %s23
      %p93 = scmp.eq.s32.totalorder %s92, 0
      %s95 = sadd.s32 %s94, 1
      %s96 = scalar_select %p93, %s94, %s95
      %p99 = pneg %p93
      %p100 = scmp.eq.s32.totalorder %s16, 3
      %p101 = por %p99, %p100
      %p102 = scmp.ne.s32.totalorder %s94, %s97
      %p103 = scmp.eq.s32.totalorder %s16, 0
      %p104 = por %p102, %p103
      %p105 = scmp.ne.s32.totalorder %s94, %s97
      %p106 = scmp.eq.s32.totalorder %s21, 3
      %p107 = por %p105, %p106
      %p108 = scmp.ne.s32.totalorder %s97, %s98
      %p109 = scmp.eq.s32.totalorder %s21, 0
      %p110 = por %p108, %p109
      %p111 = scmp.ne.s32.totalorder %s97, %s98
      %p112 = scmp.eq.s32.totalorder %s22, 3
      %p113 = por %p111, %p112
      %p115 = scmp.ne.s32.totalorder %s98, %s114
      %p116 = scmp.eq.s32.totalorder %s22, 0
      %p117 = por %p115, %p116
      %p118 = scmp.le.s32.totalorder 1, %s16
      %p119 = scmp.lt.s32.totalorder %s16, 5
      %p120 = pnand %p118, %p119
      %p121 = pneg %p120
      // Predicated region
      $region9: #{tpu_custom_call.1} parent=5 // pred_check
        _
      $region10: #{tpu_custom_call.1} parent=5 // pred_check_branch
        %123 = sbr.rel (%p120) target = $region12
      $region11: #{tpu_custom_call.1} parent=5 // pred_region
        %s124 = ssub.s32 %s16, 1
        // Predicated region
        $region13: #{tpu_custom_call.1} parent=11 // pred_check
          %p125 = pneg %p63
        $region14: #{tpu_custom_call.1} parent=11 // pred_check_branch
          %127 = sbr.rel (%p125) target = $region16
        $region15: #{tpu_custom_call.1} parent=11 // pred_region
          %129 = vsyncadd [#allocation6], 0
          %s131 = sshll.u32 %s1, 4
          %s132 = int_to_ptr.hbm [resolvable:$true] %s131
          %s133 = sshll.u32 [#allocation5], 4
          %s134 = int_to_ptr.vmem [resolvable:$true] %s133
          %136 = dma.hbm_to_vmem [thread:$0]  %s132, 16, %s134, [#allocation6]
        $region16: #{tpu_custom_call.1} parent=11 // pred_fallthru
          _
        // Predicated region
        $region17: #{tpu_custom_call.1} parent=11 // pred_check
          %p137 = pneg %p84
        $region18: #{tpu_custom_call.1} parent=11 // pred_check_branch
          %139 = sbr.rel (%p137) target = $region20
        $region19: #{tpu_custom_call.1} parent=11 // pred_region
          _
        $region20: #{tpu_custom_call.1} parent=11 // pred_fallthru
          _
      $region12: #{tpu_custom_call.1} parent=5 // pred_fallthru
        _
      %p140 = scmp.lt.s32.totalorder %s16, 4
      // Predicated region
      $region21: #{tpu_custom_call.1} parent=5 // pred_check
        %p141 = pneg %p140
      $region22: #{tpu_custom_call.1} parent=5 // pred_check_branch
        %143 = sbr.rel (%p141) target = $region24
      $region23: #{tpu_custom_call.1} parent=5 // pred_region
        // Predicated region
        $region25: #{tpu_custom_call.1} parent=23 // pred_check
          %p144 = pneg %p36
        $region26: #{tpu_custom_call.1} parent=23 // pred_check_branch
          %146 = sbr.rel (%p144) target = $region28
        $region27: #{tpu_custom_call.1} parent=23 // pred_region
          %s147 = sand.u32 %s26, 1
          %s148 = scalar_lea.sflag [#allocation3], %s147
          %s149 = sand.u32 %s26, 1
          %s150 = smul.addr %s149, 256
          %s151 = scalar_lea.vmem [#allocation2], %s150
          %s152 = smul.u32 32, %s16
          %154 = vsyncadd %s148, 0
          %s155 = smul.addr %s152, 8
          %s156 = scalar_lea.hbm %s0, %s155
          %s157 = sshll.u32 %s156, 4
          %s158 = int_to_ptr.hbm [resolvable:$true] %s157
          %s159 = sshll.u32 %s151, 4
          %s160 = int_to_ptr.vmem [resolvable:$true] %s159
          %165 = dma.hbm_to_vmem [thread:$0]  %s158, 4096, %s160, %s148, 128, 128, 8
        $region28: #{tpu_custom_call.1} parent=23 // pred_fallthru
          _
      $region24: #{tpu_custom_call.1} parent=5 // pred_fallthru
        _
      %p166 = scmp.le.s32.totalorder 1, %s16
      %p167 = scmp.lt.s32.totalorder %s16, 5
      %p168 = pnand %p166, %p167
      %p169 = pneg %p168
      // Predicated region
      $region29: #{tpu_custom_call.1} parent=5 // pred_check
        _
      $region30: #{tpu_custom_call.1} parent=5 // pred_check_branch
        %171 = sbr.rel (%p168) target = $region32
      $region31: #{tpu_custom_call.1} parent=5 // pred_region
        %s172 = ssub.s32 %s16, 1
        %s173 = sand.u32 %s29, 1
        %s174 = scalar_lea.sflag [#allocation3], %s173
        %s175 = sand.u32 %s29, 1
        %s176 = smul.addr %s175, 256
        %s177 = scalar_lea.vmem [#allocation2], %s176
        // Predicated region
        $region33: #{tpu_custom_call.1} parent=31 // pred_check
          %p178 = pneg %p42
        $region34: #{tpu_custom_call.1} parent=31 // pred_check_branch
          %180 = sbr.rel (%p178) target = $region36
        $region35: #{tpu_custom_call.1} parent=31 // pred_region
          %182 = dma.done %s174, 4096
        $region36: #{tpu_custom_call.1} parent=31 // pred_fallthru
          _
        // Predicated region
        $region37: #{tpu_custom_call.1} parent=31 // pred_check
          %p183 = pneg %p63
        $region38: #{tpu_custom_call.1} parent=31 // pred_check_branch
          %185 = sbr.rel (%p183) target = $region40
        $region39: #{tpu_custom_call.1} parent=31 // pred_region
          %187 = dma.done [#allocation6], 16
        $region40: #{tpu_custom_call.1} parent=31 // pred_fallthru
          _
        %s188 = sand.u32 %s29, 1
        %s189 = scalar_lea.sflag [#allocation3], %s188
        %s190 = sand.u32 %s29, 1
        %s191 = smul.addr %s190, 256
        %s192 = scalar_lea.vmem [#allocation2], %s191
        %p193 = pneg %p42
        %p194 = pneg %p39
        %p195 = pneg %p63
        %p196 = pneg %p60
        %p197 = pneg %p84
        %p198 = pneg %p81
        %p199 = pneg %p110
        %p200 = pneg %p107
        %s201 = sand.u32 %s97, 1
        %s202 = scalar_lea.sflag [#allocation4], %s201
        %s203 = sand.u32 %s97, 1
        %s204 = smul.addr %s203, 256
        %s205 = scalar_lea.vmem [#allocation7], %s204
        %s206 = smul.u32 32, %s21
        %s207 = smul.u32 32, %s21
        %v208 = vld [vmem:[%s177] sm:$0xff]
        %v209 = vld [vmem:[%s177 + $0x8] sm:$0xff]
        %v210 = vld [vmem:[%s177 + $0x10] sm:$0xff]
        %v211 = vld [vmem:[%s177 + $0x18] sm:$0xff]
        %v212 = vld [vmem:[%s177 + $0x20] sm:$0xff]
        %v213 = vld [vmem:[%s177 + $0x28] sm:$0xff]
        %v214 = vld [vmem:[%s177 + $0x30] sm:$0xff]
        %v215 = vld [vmem:[%s177 + $0x38] sm:$0xff]
        %v216 = vld [vmem:[%s177 + $0x40] sm:$0xff]
        %v217 = vld [vmem:[%s177 + $0x48] sm:$0xff]
        %v218 = vld [vmem:[%s177 + $0x50] sm:$0xff]
        %v219 = vld [vmem:[%s177 + $0x58] sm:$0xff]
        %v220 = vld [vmem:[%s177 + $0x60] sm:$0xff]
        %v221 = vld [vmem:[%s177 + $0x68] sm:$0xff]
        %v222 = vld [vmem:[%s177 + $0x70] sm:$0xff]
        %v223 = vld [vmem:[%s177 + $0x78] sm:$0xff]
        %v224 = vld [vmem:[%s177 + $0x80] sm:$0xff]
        %v225 = vld [vmem:[%s177 + $0x88] sm:$0xff]
        %v226 = vld [vmem:[%s177 + $0x90] sm:$0xff]
        %v227 = vld [vmem:[%s177 + $0x98] sm:$0xff]
        %v228 = vld [vmem:[%s177 + $0xa0] sm:$0xff]
        %v229 = vld [vmem:[%s177 + $0xa8] sm:$0xff]
        %v230 = vld [vmem:[%s177 + $0xb0] sm:$0xff]
        %v231 = vld [vmem:[%s177 + $0xb8] sm:$0xff]
        %v232 = vld [vmem:[%s177 + $0xc0] sm:$0xff]
        %v233 = vld [vmem:[%s177 + $0xc8] sm:$0xff]
        %v234 = vld [vmem:[%s177 + $0xd0] sm:$0xff]
        %v235 = vld [vmem:[%s177 + $0xd8] sm:$0xff]
        %v236 = vld [vmem:[%s177 + $0xe0] sm:$0xff]
        %v237 = vld [vmem:[%s177 + $0xe8] sm:$0xff]
        %v238 = vld [vmem:[%s177 + $0xf0] sm:$0xff]
        %v239 = vld [vmem:[%s177 + $0xf8] sm:$0xff]
        %240 = vadd.xlane.f32.xlu0 %v208
        %v241 = vpop.xlane.xlu0 %240
        %242 = vadd.xlane.f32.xlu0 %v209
        %v243 = vpop.xlane.xlu0 %242
        %244 = vadd.xlane.f32.xlu0 %v210
        %v245 = vpop.xlane.xlu0 %244
        %246 = vadd.xlane.f32.xlu0 %v211
        %v247 = vpop.xlane.xlu0 %246
        %248 = vadd.xlane.f32.xlu0 %v212
        %v249 = vpop.xlane.xlu0 %248
        %250 = vadd.xlane.f32.xlu0 %v213
        %v251 = vpop.xlane.xlu0 %250
        %252 = vadd.xlane.f32.xlu0 %v214
        %v253 = vpop.xlane.xlu0 %252
        %254 = vadd.xlane.f32.xlu0 %v215
        %v255 = vpop.xlane.xlu0 %254
        %256 = vadd.xlane.f32.xlu0 %v216
        %v257 = vpop.xlane.xlu0 %256
        %258 = vadd.xlane.f32.xlu0 %v217
        %v259 = vpop.xlane.xlu0 %258
        %260 = vadd.xlane.f32.xlu0 %v218
        %v261 = vpop.xlane.xlu0 %260
        %262 = vadd.xlane.f32.xlu0 %v219
        %v263 = vpop.xlane.xlu0 %262
        %264 = vadd.xlane.f32.xlu0 %v220
        %v265 = vpop.xlane.xlu0 %264
        %266 = vadd.xlane.f32.xlu0 %v221
        %v267 = vpop.xlane.xlu0 %266
        %268 = vadd.xlane.f32.xlu0 %v222
        %v269 = vpop.xlane.xlu0 %268
        %270 = vadd.xlane.f32.xlu0 %v223
        %v271 = vpop.xlane.xlu0 %270
        %272 = vadd.xlane.f32.xlu0 %v224
        %v273 = vpop.xlane.xlu0 %272
        %274 = vadd.xlane.f32.xlu0 %v225
        %v275 = vpop.xlane.xlu0 %274
        %276 = vadd.xlane.f32.xlu0 %v226
        %v277 = vpop.xlane.xlu0 %276
        %278 = vadd.xlane.f32.xlu0 %v227
        %v279 = vpop.xlane.xlu0 %278
        %280 = vadd.xlane.f32.xlu0 %v228
        %v281 = vpop.xlane.xlu0 %280
        %282 = vadd.xlane.f32.xlu0 %v229
        %v283 = vpop.xlane.xlu0 %282
        %284 = vadd.xlane.f32.xlu0 %v230
        %v285 = vpop.xlane.xlu0 %284
        %286 = vadd.xlane.f32.xlu0 %v231
        %v287 = vpop.xlane.xlu0 %286
        %288 = vadd.xlane.f32.xlu0 %v232
        %v289 = vpop.xlane.xlu0 %288
        %290 = vadd.xlane.f32.xlu0 %v233
        %v291 = vpop.xlane.xlu0 %290
        %292 = vadd.xlane.f32.xlu0 %v234
        %v293 = vpop.xlane.xlu0 %292
        %294 = vadd.xlane.f32.xlu0 %v235
        %v295 = vpop.xlane.xlu0 %294
        %296 = vadd.xlane.f32.xlu0 %v236
        %v297 = vpop.xlane.xlu0 %296
        %298 = vadd.xlane.f32.xlu0 %v237
        %v299 = vpop.xlane.xlu0 %298
        %300 = vadd.xlane.f32.xlu0 %v238
        %v301 = vpop.xlane.xlu0 %300
        %302 = vadd.xlane.f32.xlu0 %v239
        %v303 = vpop.xlane.xlu0 %302
        %v304 = vrcp.pop 128.0
        %v305 = vmul.f32 128.0, %v304
        %v306 = vsub.f32 1.0, %v305
        %v307 = vmul.f32 %v304, %v306
        %v308 = vadd.f32 %v304, %v307
        %vm309 = vweird.f32 %v304
        %v310 = vsel %vm309, %v304, %v308
        %v311 = vmul.f32 %v241, %v310
        %v312 = vmul.f32 %v243, %v310
        %v313 = vmul.f32 %v245, %v310
        %v314 = vmul.f32 %v247, %v310
        %v315 = vmul.f32 %v249, %v310
        %v316 = vmul.f32 %v251, %v310
        %v317 = vmul.f32 %v253, %v310
        %v318 = vmul.f32 %v255, %v310
        %v319 = vmul.f32 %v257, %v310
        %v320 = vmul.f32 %v259, %v310
        %v321 = vmul.f32 %v261, %v310
        %v322 = vmul.f32 %v263, %v310
        %v323 = vmul.f32 %v265, %v310
        %v324 = vmul.f32 %v267, %v310
        %v325 = vmul.f32 %v269, %v310
        %v326 = vmul.f32 %v271, %v310
        %v327 = vmul.f32 %v273, %v310
        %v328 = vmul.f32 %v275, %v310
        %v329 = vmul.f32 %v277, %v310
        %v330 = vmul.f32 %v279, %v310
        %v331 = vmul.f32 %v281, %v310
        %v332 = vmul.f32 %v283, %v310
        %v333 = vmul.f32 %v285, %v310
        %v334 = vmul.f32 %v287, %v310
        %v335 = vmul.f32 %v289, %v310
        %v336 = vmul.f32 %v291, %v310
        %v337 = vmul.f32 %v293, %v310
        %v338 = vmul.f32 %v295, %v310
        %v339 = vmul.f32 %v297, %v310
        %v340 = vmul.f32 %v299, %v310
        %v341 = vmul.f32 %v301, %v310
        %v342 = vmul.f32 %v303, %v310
        %v343 = vsub.f32 %v208, %v311
        %v344 = vsub.f32 %v209, %v312
        %v345 = vsub.f32 %v210, %v313
        %v346 = vsub.f32 %v211, %v314
        %v347 = vsub.f32 %v212, %v315
        %v348 = vsub.f32 %v213, %v316
        %v349 = vsub.f32 %v214, %v317
        %v350 = vsub.f32 %v215, %v318
        %v351 = vsub.f32 %v216, %v319
        %v352 = vsub.f32 %v217, %v320
        %v353 = vsub.f32 %v218, %v321
        %v354 = vsub.f32 %v219, %v322
        %v355 = vsub.f32 %v220, %v323
        %v356 = vsub.f32 %v221, %v324
        %v357 = vsub.f32 %v222, %v325
        %v358 = vsub.f32 %v223, %v326
        %v359 = vsub.f32 %v224, %v327
        %v360 = vsub.f32 %v225, %v328
        %v361 = vsub.f32 %v226, %v329
        %v362 = vsub.f32 %v227, %v330
        %v363 = vsub.f32 %v228, %v331
        %v364 = vsub.f32 %v229, %v332
        %v365 = vsub.f32 %v230, %v333
        %v366 = vsub.f32 %v231, %v334
        %v367 = vsub.f32 %v232, %v335
        %v368 = vsub.f32 %v233, %v336
        %v369 = vsub.f32 %v234, %v337
        %v370 = vsub.f32 %v235, %v338
        %v371 = vsub.f32 %v236, %v339
        %v372 = vsub.f32 %v237, %v340
        %v373 = vsub.f32 %v238, %v341
        %v374 = vsub.f32 %v239, %v342
        %v375 = vmul.f32 %v343, %v343
        %v376 = vmul.f32 %v344, %v344
        %v377 = vmul.f32 %v345, %v345
        %v378 = vmul.f32 %v346, %v346
        %v379 = vmul.f32 %v347, %v347
        %v380 = vmul.f32 %v348, %v348
        %v381 = vmul.f32 %v349, %v349
        %v382 = vmul.f32 %v350, %v350
        %v383 = vmul.f32 %v351, %v351
        %v384 = vmul.f32 %v352, %v352
        %v385 = vmul.f32 %v353, %v353
        %v386 = vmul.f32 %v354, %v354
        %v387 = vmul.f32 %v355, %v355
        %v388 = vmul.f32 %v356, %v356
        %v389 = vmul.f32 %v357, %v357
        %v390 = vmul.f32 %v358, %v358
        %v391 = vmul.f32 %v359, %v359
        %v392 = vmul.f32 %v360, %v360
        %v393 = vmul.f32 %v361, %v361
        %v394 = vmul.f32 %v362, %v362
        %v395 = vmul.f32 %v363, %v363
        %v396 = vmul.f32 %v364, %v364
        %v397 = vmul.f32 %v365, %v365
        %v398 = vmul.f32 %v366, %v366
        %v399 = vmul.f32 %v367, %v367
        %v400 = vmul.f32 %v368, %v368
        %v401 = vmul.f32 %v369, %v369
        %v402 = vmul.f32 %v370, %v370
        %v403 = vmul.f32 %v371, %v371
        %v404 = vmul.f32 %v372, %v372
        %v405 = vmul.f32 %v373, %v373
        %v406 = vmul.f32 %v374, %v374
        %407 = vadd.xlane.f32.xlu0 %v375
        %v408 = vpop.xlane.xlu0 %407
        %409 = vadd.xlane.f32.xlu0 %v376
        %v410 = vpop.xlane.xlu0 %409
        %411 = vadd.xlane.f32.xlu0 %v377
        %v412 = vpop.xlane.xlu0 %411
        %413 = vadd.xlane.f32.xlu0 %v378
        %v414 = vpop.xlane.xlu0 %413
        %415 = vadd.xlane.f32.xlu0 %v379
        %v416 = vpop.xlane.xlu0 %415
        %417 = vadd.xlane.f32.xlu0 %v380
        %v418 = vpop.xlane.xlu0 %417
        %419 = vadd.xlane.f32.xlu0 %v381
        %v420 = vpop.xlane.xlu0 %419
        %421 = vadd.xlane.f32.xlu0 %v382
        %v422 = vpop.xlane.xlu0 %421
        %423 = vadd.xlane.f32.xlu0 %v383
        %v424 = vpop.xlane.xlu0 %423
        %425 = vadd.xlane.f32.xlu0 %v384
        %v426 = vpop.xlane.xlu0 %425
        %427 = vadd.xlane.f32.xlu0 %v385
        %v428 = vpop.xlane.xlu0 %427
        %429 = vadd.xlane.f32.xlu0 %v386
        %v430 = vpop.xlane.xlu0 %429
        %431 = vadd.xlane.f32.xlu0 %v387
        %v432 = vpop.xlane.xlu0 %431
        %433 = vadd.xlane.f32.xlu0 %v388
        %v434 = vpop.xlane.xlu0 %433
        %435 = vadd.xlane.f32.xlu0 %v389
        %v436 = vpop.xlane.xlu0 %435
        %437 = vadd.xlane.f32.xlu0 %v390
        %v438 = vpop.xlane.xlu0 %437
        %439 = vadd.xlane.f32.xlu0 %v391
        %v440 = vpop.xlane.xlu0 %439
        %441 = vadd.xlane.f32.xlu0 %v392
        %v442 = vpop.xlane.xlu0 %441
        %443 = vadd.xlane.f32.xlu0 %v393
        %v444 = vpop.xlane.xlu0 %443
        %445 = vadd.xlane.f32.xlu0 %v394
        %v446 = vpop.xlane.xlu0 %445
        %447 = vadd.xlane.f32.xlu0 %v395
        %v448 = vpop.xlane.xlu0 %447
        %449 = vadd.xlane.f32.xlu0 %v396
        %v450 = vpop.xlane.xlu0 %449
        %451 = vadd.xlane.f32.xlu0 %v397
        %v452 = vpop.xlane.xlu0 %451
        %453 = vadd.xlane.f32.xlu0 %v398
        %v454 = vpop.xlane.xlu0 %453
        %455 = vadd.xlane.f32.xlu0 %v399
        %v456 = vpop.xlane.xlu0 %455
        %457 = vadd.xlane.f32.xlu0 %v400
        %v458 = vpop.xlane.xlu0 %457
        %459 = vadd.xlane.f32.xlu0 %v401
        %v460 = vpop.xlane.xlu0 %459
        %461 = vadd.xlane.f32.xlu0 %v402
        %v462 = vpop.xlane.xlu0 %461
        %463 = vadd.xlane.f32.xlu0 %v403
        %v464 = vpop.xlane.xlu0 %463
        %465 = vadd.xlane.f32.xlu0 %v404
        %v466 = vpop.xlane.xlu0 %465
        %467 = vadd.xlane.f32.xlu0 %v405
        %v468 = vpop.xlane.xlu0 %467
        %469 = vadd.xlane.f32.xlu0 %v406
        %v470 = vpop.xlane.xlu0 %469
        %v471 = vmul.f32 %v408, %v310
        %v472 = vmul.f32 %v410, %v310
        %v473 = vmul.f32 %v412, %v310
        %v474 = vmul.f32 %v414, %v310
        %v475 = vmul.f32 %v416, %v310
        %v476 = vmul.f32 %v418, %v310
        %v477 = vmul.f32 %v420, %v310
        %v478 = vmul.f32 %v422, %v310
        %v479 = vmul.f32 %v424, %v310
        %v480 = vmul.f32 %v426, %v310
        %v481 = vmul.f32 %v428, %v310
        %v482 = vmul.f32 %v430, %v310
        %v483 = vmul.f32 %v432, %v310
        %v484 = vmul.f32 %v434, %v310
        %v485 = vmul.f32 %v436, %v310
        %v486 = vmul.f32 %v438, %v310
        %v487 = vmul.f32 %v440, %v310
        %v488 = vmul.f32 %v442, %v310
        %v489 = vmul.f32 %v444, %v310
        %v490 = vmul.f32 %v446, %v310
        %v491 = vmul.f32 %v448, %v310
        %v492 = vmul.f32 %v450, %v310
        %v493 = vmul.f32 %v452, %v310
        %v494 = vmul.f32 %v454, %v310
        %v495 = vmul.f32 %v456, %v310
        %v496 = vmul.f32 %v458, %v310
        %v497 = vmul.f32 %v460, %v310
        %v498 = vmul.f32 %v462, %v310
        %v499 = vmul.f32 %v464, %v310
        %v500 = vmul.f32 %v466, %v310
        %v501 = vmul.f32 %v468, %v310
        %v502 = vmul.f32 %v470, %v310
        %v503 = vadd.f32 %v471, 1e-05
        %v504 = vadd.f32 %v472, 1e-05
        %v505 = vadd.f32 %v473, 1e-05
        %v506 = vadd.f32 %v474, 1e-05
        %v507 = vadd.f32 %v475, 1e-05
        %v508 = vadd.f32 %v476, 1e-05
        %v509 = vadd.f32 %v477, 1e-05
        %v510 = vadd.f32 %v478, 1e-05
        %v511 = vadd.f32 %v479, 1e-05
        %v512 = vadd.f32 %v480, 1e-05
        %v513 = vadd.f32 %v481, 1e-05
        %v514 = vadd.f32 %v482, 1e-05
        %v515 = vadd.f32 %v483, 1e-05
        %v516 = vadd.f32 %v484, 1e-05
        %v517 = vadd.f32 %v485, 1e-05
        %v518 = vadd.f32 %v486, 1e-05
        %v519 = vadd.f32 %v487, 1e-05
        %v520 = vadd.f32 %v488, 1e-05
        %v521 = vadd.f32 %v489, 1e-05
        %v522 = vadd.f32 %v490, 1e-05
        %v523 = vadd.f32 %v491, 1e-05
        %v524 = vadd.f32 %v492, 1e-05
        %v525 = vadd.f32 %v493, 1e-05
        %v526 = vadd.f32 %v494, 1e-05
        %v527 = vadd.f32 %v495, 1e-05
        %v528 = vadd.f32 %v496, 1e-05
        %v529 = vadd.f32 %v497, 1e-05
        %v530 = vadd.f32 %v498, 1e-05
        %v531 = vadd.f32 %v499, 1e-05
        %v532 = vadd.f32 %v500, 1e-05
        %v533 = vadd.f32 %v501, 1e-05
        %v534 = vadd.f32 %v502, 1e-05
        %v535 = vrsqrt.pop %v503
        %v536 = vmul.f32 %v535, %v503
        %v537 = vmul.f32 %v536, %v535
        %v538 = vmul.f32 0.5, %v537
        %v539 = vsub.f32 1.5, %v538
        %v540 = vmul.f32 %v535, %v539
        %vm541 = vweird.f32 %v503
        %vm542 = vweird.f32 %v535
        %vm543 = vmor %vm541, %vm542
        %v544 = vsel %vm543, %v535, %v540
        %v545 = vrsqrt.pop %v504
        %v546 = vmul.f32 %v545, %v504
        %v547 = vmul.f32 %v546, %v545
        %v548 = vmul.f32 0.5, %v547
        %v549 = vsub.f32 1.5, %v548
        %v550 = vmul.f32 %v545, %v549
        %vm551 = vweird.f32 %v504
        %vm552 = vweird.f32 %v545
        %vm553 = vmor %vm551, %vm552
        %v554 = vsel %vm553, %v545, %v550
        %v555 = vrsqrt.pop %v505
        %v556 = vmul.f32 %v555, %v505
        %v557 = vmul.f32 %v556, %v555
        %v558 = vmul.f32 0.5, %v557
        %v559 = vsub.f32 1.5, %v558
        %v560 = vmul.f32 %v555, %v559
        %vm561 = vweird.f32 %v505
        %vm562 = vweird.f32 %v555
        %vm563 = vmor %vm561, %vm562
        %v564 = vsel %vm563, %v555, %v560
        %v565 = vrsqrt.pop %v506
        %v566 = vmul.f32 %v565, %v506
        %v567 = vmul.f32 %v566, %v565
        %v568 = vmul.f32 0.5, %v567
        %v569 = vsub.f32 1.5, %v568
        %v570 = vmul.f32 %v565, %v569
        %vm571 = vweird.f32 %v506
        %vm572 = vweird.f32 %v565
        %vm573 = vmor %vm571, %vm572
        %v574 = vsel %vm573, %v565, %v570
        %v575 = vrsqrt.pop %v507
        %v576 = vmul.f32 %v575, %v507
        %v577 = vmul.f32 %v576, %v575
        %v578 = vmul.f32 0.5, %v577
        %v579 = vsub.f32 1.5, %v578
        %v580 = vmul.f32 %v575, %v579
        %vm581 = vweird.f32 %v507
        %vm582 = vweird.f32 %v575
        %vm583 = vmor %vm581, %vm582
        %v584 = vsel %vm583, %v575, %v580
        %v585 = vrsqrt.pop %v508
        %v586 = vmul.f32 %v585, %v508
        %v587 = vmul.f32 %v586, %v585
        %v588 = vmul.f32 0.5, %v587
        %v589 = vsub.f32 1.5, %v588
        %v590 = vmul.f32 %v585, %v589
        %vm591 = vweird.f32 %v508
        %vm592 = vweird.f32 %v585
        %vm593 = vmor %vm591, %vm592
        %v594 = vsel %vm593, %v585, %v590
        %v595 = vrsqrt.pop %v509
        %v596 = vmul.f32 %v595, %v509
        %v597 = vmul.f32 %v596, %v595
        %v598 = vmul.f32 0.5, %v597
        %v599 = vsub.f32 1.5, %v598
        %v600 = vmul.f32 %v595, %v599
        %vm601 = vweird.f32 %v509
        %vm602 = vweird.f32 %v595
        %vm603 = vmor %vm601, %vm602
        %v604 = vsel %vm603, %v595, %v600
        %v605 = vrsqrt.pop %v510
        %v606 = vmul.f32 %v605, %v510
        %v607 = vmul.f32 %v606, %v605
        %v608 = vmul.f32 0.5, %v607
        %v609 = vsub.f32 1.5, %v608
        %v610 = vmul.f32 %v605, %v609
        %vm611 = vweird.f32 %v510
        %vm612 = vweird.f32 %v605
        %vm613 = vmor %vm611, %vm612
        %v614 = vsel %vm613, %v605, %v610
        %v615 = vrsqrt.pop %v511
        %v616 = vmul.f32 %v615, %v511
        %v617 = vmul.f32 %v616, %v615
        %v618 = vmul.f32 0.5, %v617
        %v619 = vsub.f32 1.5, %v618
        %v620 = vmul.f32 %v615, %v619
        %vm621 = vweird.f32 %v511
        %vm622 = vweird.f32 %v615
        %vm623 = vmor %vm621, %vm622
        %v624 = vsel %vm623, %v615, %v620
        %v625 = vrsqrt.pop %v512
        %v626 = vmul.f32 %v625, %v512
        %v627 = vmul.f32 %v626, %v625
        %v628 = vmul.f32 0.5, %v627
        %v629 = vsub.f32 1.5, %v628
        %v630 = vmul.f32 %v625, %v629
        %vm631 = vweird.f32 %v512
        %vm632 = vweird.f32 %v625
        %vm633 = vmor %vm631, %vm632
        %v634 = vsel %vm633, %v625, %v630
        %v635 = vrsqrt.pop %v513
        %v636 = vmul.f32 %v635, %v513
        %v637 = vmul.f32 %v636, %v635
        %v638 = vmul.f32 0.5, %v637
        %v639 = vsub.f32 1.5, %v638
        %v640 = vmul.f32 %v635, %v639
        %vm641 = vweird.f32 %v513
        %vm642 = vweird.f32 %v635
        %vm643 = vmor %vm641, %vm642
        %v644 = vsel %vm643, %v635, %v640
        %v645 = vrsqrt.pop %v514
        %v646 = vmul.f32 %v645, %v514
        %v647 = vmul.f32 %v646, %v645
        %v648 = vmul.f32 0.5, %v647
        %v649 = vsub.f32 1.5, %v648
        %v650 = vmul.f32 %v645, %v649
        %vm651 = vweird.f32 %v514
        %vm652 = vweird.f32 %v645
        %vm653 = vmor %vm651, %vm652
        %v654 = vsel %vm653, %v645, %v650
        %v655 = vrsqrt.pop %v515
        %v656 = vmul.f32 %v655, %v515
        %v657 = vmul.f32 %v656, %v655
        %v658 = vmul.f32 0.5, %v657
        %v659 = vsub.f32 1.5, %v658
        %v660 = vmul.f32 %v655, %v659
        %vm661 = vweird.f32 %v515
        %vm662 = vweird.f32 %v655
        %vm663 = vmor %vm661, %vm662
        %v664 = vsel %vm663, %v655, %v660
        %v665 = vrsqrt.pop %v516
        %v666 = vmul.f32 %v665, %v516
        %v667 = vmul.f32 %v666, %v665
        %v668 = vmul.f32 0.5, %v667
        %v669 = vsub.f32 1.5, %v668
        %v670 = vmul.f32 %v665, %v669
        %vm671 = vweird.f32 %v516
        %vm672 = vweird.f32 %v665
        %vm673 = vmor %vm671, %vm672
        %v674 = vsel %vm673, %v665, %v670
        %v675 = vrsqrt.pop %v517
        %v676 = vmul.f32 %v675, %v517
        %v677 = vmul.f32 %v676, %v675
        %v678 = vmul.f32 0.5, %v677
        %v679 = vsub.f32 1.5, %v678
        %v680 = vmul.f32 %v675, %v679
        %vm681 = vweird.f32 %v517
        %vm682 = vweird.f32 %v675
        %vm683 = vmor %vm681, %vm682
        %v684 = vsel %vm683, %v675, %v680
        %v685 = vrsqrt.pop %v518
        %v686 = vmul.f32 %v685, %v518
        %v687 = vmul.f32 %v686, %v685
        %v688 = vmul.f32 0.5, %v687
        %v689 = vsub.f32 1.5, %v688
        %v690 = vmul.f32 %v685, %v689
        %vm691 = vweird.f32 %v518
        %vm692 = vweird.f32 %v685
        %vm693 = vmor %vm691, %vm692
        %v694 = vsel %vm693, %v685, %v690
        %v695 = vrsqrt.pop %v519
        %v696 = vmul.f32 %v695, %v519
        %v697 = vmul.f32 %v696, %v695
        %v698 = vmul.f32 0.5, %v697
        %v699 = vsub.f32 1.5, %v698
        %v700 = vmul.f32 %v695, %v699
        %vm701 = vweird.f32 %v519
        %vm702 = vweird.f32 %v695
        %vm703 = vmor %vm701, %vm702
        %v704 = vsel %vm703, %v695, %v700
        %v705 = vrsqrt.pop %v520
        %v706 = vmul.f32 %v705, %v520
        %v707 = vmul.f32 %v706, %v705
        %v708 = vmul.f32 0.5, %v707
        %v709 = vsub.f32 1.5, %v708
        %v710 = vmul.f32 %v705, %v709
        %vm711 = vweird.f32 %v520
        %vm712 = vweird.f32 %v705
        %vm713 = vmor %vm711, %vm712
        %v714 = vsel %vm713, %v705, %v710
        %v715 = vrsqrt.pop %v521
        %v716 = vmul.f32 %v715, %v521
        %v717 = vmul.f32 %v716, %v715
        %v718 = vmul.f32 0.5, %v717
        %v719 = vsub.f32 1.5, %v718
        %v720 = vmul.f32 %v715, %v719
        %vm721 = vweird.f32 %v521
        %vm722 = vweird.f32 %v715
        %vm723 = vmor %vm721, %vm722
        %v724 = vsel %vm723, %v715, %v720
        %v725 = vrsqrt.pop %v522
        %v726 = vmul.f32 %v725, %v522
        %v727 = vmul.f32 %v726, %v725
        %v728 = vmul.f32 0.5, %v727
        %v729 = vsub.f32 1.5, %v728
        %v730 = vmul.f32 %v725, %v729
        %vm731 = vweird.f32 %v522
        %vm732 = vweird.f32 %v725
        %vm733 = vmor %vm731, %vm732
        %v734 = vsel %vm733, %v725, %v730
        %v735 = vrsqrt.pop %v523
        %v736 = vmul.f32 %v735, %v523
        %v737 = vmul.f32 %v736, %v735
        %v738 = vmul.f32 0.5, %v737
        %v739 = vsub.f32 1.5, %v738
        %v740 = vmul.f32 %v735, %v739
        %vm741 = vweird.f32 %v523
        %vm742 = vweird.f32 %v735
        %vm743 = vmor %vm741, %vm742
        %v744 = vsel %vm743, %v735, %v740
        %v745 = vrsqrt.pop %v524
        %v746 = vmul.f32 %v745, %v524
        %v747 = vmul.f32 %v746, %v745
        %v748 = vmul.f32 0.5, %v747
        %v749 = vsub.f32 1.5, %v748
        %v750 = vmul.f32 %v745, %v749
        %vm751 = vweird.f32 %v524
        %vm752 = vweird.f32 %v745
        %vm753 = vmor %vm751, %vm752
        %v754 = vsel %vm753, %v745, %v750
        %v755 = vrsqrt.pop %v525
        %v756 = vmul.f32 %v755, %v525
        %v757 = vmul.f32 %v756, %v755
        %v758 = vmul.f32 0.5, %v757
        %v759 = vsub.f32 1.5, %v758
        %v760 = vmul.f32 %v755, %v759
        %vm761 = vweird.f32 %v525
        %vm762 = vweird.f32 %v755
        %vm763 = vmor %vm761, %vm762
        %v764 = vsel %vm763, %v755, %v760
        %v765 = vrsqrt.pop %v526
        %v766 = vmul.f32 %v765, %v526
        %v767 = vmul.f32 %v766, %v765
        %v768 = vmul.f32 0.5, %v767
        %v769 = vsub.f32 1.5, %v768
        %v770 = vmul.f32 %v765, %v769
        %vm771 = vweird.f32 %v526
        %vm772 = vweird.f32 %v765
        %vm773 = vmor %vm771, %vm772
        %v774 = vsel %vm773, %v765, %v770
        %v775 = vrsqrt.pop %v527
        %v776 = vmul.f32 %v775, %v527
        %v777 = vmul.f32 %v776, %v775
        %v778 = vmul.f32 0.5, %v777
        %v779 = vsub.f32 1.5, %v778
        %v780 = vmul.f32 %v775, %v779
        %vm781 = vweird.f32 %v527
        %vm782 = vweird.f32 %v775
        %vm783 = vmor %vm781, %vm782
        %v784 = vsel %vm783, %v775, %v780
        %v785 = vrsqrt.pop %v528
        %v786 = vmul.f32 %v785, %v528
        %v787 = vmul.f32 %v786, %v785
        %v788 = vmul.f32 0.5, %v787
        %v789 = vsub.f32 1.5, %v788
        %v790 = vmul.f32 %v785, %v789
        %vm791 = vweird.f32 %v528
        %vm792 = vweird.f32 %v785
        %vm793 = vmor %vm791, %vm792
        %v794 = vsel %vm793, %v785, %v790
        %v795 = vrsqrt.pop %v529
        %v796 = vmul.f32 %v795, %v529
        %v797 = vmul.f32 %v796, %v795
        %v798 = vmul.f32 0.5, %v797
        %v799 = vsub.f32 1.5, %v798
        %v800 = vmul.f32 %v795, %v799
        %vm801 = vweird.f32 %v529
        %vm802 = vweird.f32 %v795
        %vm803 = vmor %vm801, %vm802
        %v804 = vsel %vm803, %v795, %v800
        %v805 = vrsqrt.pop %v530
        %v806 = vmul.f32 %v805, %v530
        %v807 = vmul.f32 %v806, %v805
        %v808 = vmul.f32 0.5, %v807
        %v809 = vsub.f32 1.5, %v808
        %v810 = vmul.f32 %v805, %v809
        %vm811 = vweird.f32 %v530
        %vm812 = vweird.f32 %v805
        %vm813 = vmor %vm811, %vm812
        %v814 = vsel %vm813, %v805, %v810
        %v815 = vrsqrt.pop %v531
        %v816 = vmul.f32 %v815, %v531
        %v817 = vmul.f32 %v816, %v815
        %v818 = vmul.f32 0.5, %v817
        %v819 = vsub.f32 1.5, %v818
        %v820 = vmul.f32 %v815, %v819
        %vm821 = vweird.f32 %v531
        %vm822 = vweird.f32 %v815
        %vm823 = vmor %vm821, %vm822
        %v824 = vsel %vm823, %v815, %v820
        %v825 = vrsqrt.pop %v532
        %v826 = vmul.f32 %v825, %v532
        %v827 = vmul.f32 %v826, %v825
        %v828 = vmul.f32 0.5, %v827
        %v829 = vsub.f32 1.5, %v828
        %v830 = vmul.f32 %v825, %v829
        %vm831 = vweird.f32 %v532
        %vm832 = vweird.f32 %v825
        %vm833 = vmor %vm831, %vm832
        %v834 = vsel %vm833, %v825, %v830
        %v835 = vrsqrt.pop %v533
        %v836 = vmul.f32 %v835, %v533
        %v837 = vmul.f32 %v836, %v835
        %v838 = vmul.f32 0.5, %v837
        %v839 = vsub.f32 1.5, %v838
        %v840 = vmul.f32 %v835, %v839
        %vm841 = vweird.f32 %v533
        %vm842 = vweird.f32 %v835
        %vm843 = vmor %vm841, %vm842
        %v844 = vsel %vm843, %v835, %v840
        %v845 = vrsqrt.pop %v534
        %v846 = vmul.f32 %v845, %v534
        %v847 = vmul.f32 %v846, %v845
        %v848 = vmul.f32 0.5, %v847
        %v849 = vsub.f32 1.5, %v848
        %v850 = vmul.f32 %v845, %v849
        %vm851 = vweird.f32 %v534
        %vm852 = vweird.f32 %v845
        %vm853 = vmor %vm851, %vm852
        %v854 = vsel %vm853, %v845, %v850
        %v855 = vmul.f32 %v343, %v544
        %v856 = vmul.f32 %v344, %v554
        %v857 = vmul.f32 %v345, %v564
        %v858 = vmul.f32 %v346, %v574
        %v859 = vmul.f32 %v347, %v584
        %v860 = vmul.f32 %v348, %v594
        %v861 = vmul.f32 %v349, %v604
        %v862 = vmul.f32 %v350, %v614
        %v863 = vmul.f32 %v351, %v624
        %v864 = vmul.f32 %v352, %v634
        %v865 = vmul.f32 %v353, %v644
        %v866 = vmul.f32 %v354, %v654
        %v867 = vmul.f32 %v355, %v664
        %v868 = vmul.f32 %v356, %v674
        %v869 = vmul.f32 %v357, %v684
        %v870 = vmul.f32 %v358, %v694
        %v871 = vmul.f32 %v359, %v704
        %v872 = vmul.f32 %v360, %v714
        %v873 = vmul.f32 %v361, %v724
        %v874 = vmul.f32 %v362, %v734
        %v875 = vmul.f32 %v363, %v744
        %v876 = vmul.f32 %v364, %v754
        %v877 = vmul.f32 %v365, %v764
        %v878 = vmul.f32 %v366, %v774
        %v879 = vmul.f32 %v367, %v784
        %v880 = vmul.f32 %v368, %v794
        %v881 = vmul.f32 %v369, %v804
        %v882 = vmul.f32 %v370, %v814
        %v883 = vmul.f32 %v371, %v824
        %v884 = vmul.f32 %v372, %v834
        %v885 = vmul.f32 %v373, %v844
        %v886 = vmul.f32 %v374, %v854
        %v887 = vld [vmem:[#allocation5] sm:$0x1]
        %v889 = vperm.slane %v887, 0
        %v891 = vmul.f32 %v855, %v889
        %v892 = vmul.f32 %v856, %v889
        %v893 = vmul.f32 %v857, %v889
        %v894 = vmul.f32 %v858, %v889
        %v895 = vmul.f32 %v859, %v889
        %v896 = vmul.f32 %v860, %v889
        %v897 = vmul.f32 %v861, %v889
        %v898 = vmul.f32 %v862, %v889
        %v899 = vmul.f32 %v863, %v889
        %v900 = vmul.f32 %v864, %v889
        %v901 = vmul.f32 %v865, %v889
        %v902 = vmul.f32 %v866, %v889
        %v903 = vmul.f32 %v867, %v889
        %v904 = vmul.f32 %v868, %v889
        %v905 = vmul.f32 %v869, %v889
        %v906 = vmul.f32 %v870, %v889
        %v907 = vmul.f32 %v871, %v889
        %v908 = vmul.f32 %v872, %v889
        %v909 = vmul.f32 %v873, %v889
        %v910 = vmul.f32 %v874, %v889
        %v911 = vmul.f32 %v875, %v889
        %v912 = vmul.f32 %v876, %v889
        %v913 = vmul.f32 %v877, %v889
        %v914 = vmul.f32 %v878, %v889
        %v915 = vmul.f32 %v879, %v889
        %v916 = vmul.f32 %v880, %v889
        %v917 = vmul.f32 %v881, %v889
        %v918 = vmul.f32 %v882, %v889
        %v919 = vmul.f32 %v883, %v889
        %v920 = vmul.f32 %v884, %v889
        %v921 = vmul.f32 %v885, %v889
        %v922 = vmul.f32 %v886, %v889
        %v923 = vld [vmem:[%s2] sm:$0x1]
        %v925 = vperm.slane %v923, 0
        %v927 = vadd.f32 %v891, %v925
        %v928 = vadd.f32 %v892, %v925
        %v929 = vadd.f32 %v893, %v925
        %v930 = vadd.f32 %v894, %v925
        %v931 = vadd.f32 %v895, %v925
        %v932 = vadd.f32 %v896, %v925
        %v933 = vadd.f32 %v897, %v925
        %v934 = vadd.f32 %v898, %v925
        %v935 = vadd.f32 %v899, %v925
        %v936 = vadd.f32 %v900, %v925
        %v937 = vadd.f32 %v901, %v925
        %v938 = vadd.f32 %v902, %v925
        %v939 = vadd.f32 %v903, %v925
        %v940 = vadd.f32 %v904, %v925
        %v941 = vadd.f32 %v905, %v925
        %v942 = vadd.f32 %v906, %v925
        %v943 = vadd.f32 %v907, %v925
        %v944 = vadd.f32 %v908, %v925
        %v945 = vadd.f32 %v909, %v925
        %v946 = vadd.f32 %v910, %v925
        %v947 = vadd.f32 %v911, %v925
        %v948 = vadd.f32 %v912, %v925
        %v949 = vadd.f32 %v913, %v925
        %v950 = vadd.f32 %v914, %v925
        %v951 = vadd.f32 %v915, %v925
        %v952 = vadd.f32 %v916, %v925
        %v953 = vadd.f32 %v917, %v925
        %v954 = vadd.f32 %v918, %v925
        %v955 = vadd.f32 %v919, %v925
        %v956 = vadd.f32 %v920, %v925
        %v957 = vadd.f32 %v921, %v925
        %v958 = vadd.f32 %v922, %v925
        %959 = vst [vmem:[%s205] sm:$0xff] %v927
        %960 = vst [vmem:[%s205 + $0x8] sm:$0xff] %v928
        %961 = vst [vmem:[%s205 + $0x10] sm:$0xff] %v929
        %962 = vst [vmem:[%s205 + $0x18] sm:$0xff] %v930
        %963 = vst [vmem:[%s205 + $0x20] sm:$0xff] %v931
        %964 = vst [vmem:[%s205 + $0x28] sm:$0xff] %v932
        %965 = vst [vmem:[%s205 + $0x30] sm:$0xff] %v933
        %966 = vst [vmem:[%s205 + $0x38] sm:$0xff] %v934
        %967 = vst [vmem:[%s205 + $0x40] sm:$0xff] %v935
        %968 = vst [vmem:[%s205 + $0x48] sm:$0xff] %v936
        %969 = vst [vmem:[%s205 + $0x50] sm:$0xff] %v937
        %970 = vst [vmem:[%s205 + $0x58] sm:$0xff] %v938
        %971 = vst [vmem:[%s205 + $0x60] sm:$0xff] %v939
        %972 = vst [vmem:[%s205 + $0x68] sm:$0xff] %v940
        %973 = vst [vmem:[%s205 + $0x70] sm:$0xff] %v941
        %974 = vst [vmem:[%s205 + $0x78] sm:$0xff] %v942
        %975 = vst [vmem:[%s205 + $0x80] sm:$0xff] %v943
        %976 = vst [vmem:[%s205 + $0x88] sm:$0xff] %v944
        %977 = vst [vmem:[%s205 + $0x90] sm:$0xff] %v945
        %978 = vst [vmem:[%s205 + $0x98] sm:$0xff] %v946
        %979 = vst [vmem:[%s205 + $0xa0] sm:$0xff] %v947
        %980 = vst [vmem:[%s205 + $0xa8] sm:$0xff] %v948
        %981 = vst [vmem:[%s205 + $0xb0] sm:$0xff] %v949
        %982 = vst [vmem:[%s205 + $0xb8] sm:$0xff] %v950
        %983 = vst [vmem:[%s205 + $0xc0] sm:$0xff] %v951
        %984 = vst [vmem:[%s205 + $0xc8] sm:$0xff] %v952
        %985 = vst [vmem:[%s205 + $0xd0] sm:$0xff] %v953
        %986 = vst [vmem:[%s205 + $0xd8] sm:$0xff] %v954
        %987 = vst [vmem:[%s205 + $0xe0] sm:$0xff] %v955
        %988 = vst [vmem:[%s205 + $0xe8] sm:$0xff] %v956
        %989 = vst [vmem:[%s205 + $0xf0] sm:$0xff] %v957
        %990 = vst [vmem:[%s205 + $0xf8] sm:$0xff] %v958
        %s991 = sand.u32 %s97, 1
        %s992 = scalar_lea.sflag [#allocation4], %s991
        %s993 = sand.u32 %s97, 1
        %s994 = smul.addr %s993, 256
        %s995 = scalar_lea.vmem [#allocation7], %s994
        // Predicated region
        $region41: #{tpu_custom_call.1} parent=31 // pred_check
          %p996 = pneg %p107
        $region42: #{tpu_custom_call.1} parent=31 // pred_check_branch
          %998 = sbr.rel (%p996) target = $region44
        $region43: #{tpu_custom_call.1} parent=31 // pred_region
          %s999 = smul.u32 32, %s21
          %1001 = vsyncadd %s992, 0
          %s1002 = smul.addr %s999, 8
          %s1003 = scalar_lea.hbm %s3, %s1002
          %s1004 = sshll.u32 %s995, 4
          %s1005 = int_to_ptr.vmem [resolvable:$true] %s1004
          %s1006 = sshll.u32 %s1003, 4
          %s1007 = int_to_ptr.hbm [resolvable:$true] %s1006
          %1012 = dma.vmem_to_hbm [thread:$0]  %s1005, 4096, %s1007, %s992, 128, 128, 8
        $region44: #{tpu_custom_call.1} parent=31 // pred_fallthru
          _
      $region32: #{tpu_custom_call.1} parent=5 // pred_fallthru
        _
      %p1013 = scmp.le.s32.totalorder 2, %s16
      // Predicated region
      $region45: #{tpu_custom_call.1} parent=5 // pred_check
        %p1014 = pneg %p1013
      $region46: #{tpu_custom_call.1} parent=5 // pred_check_branch
        %1016 = sbr.rel (%p1014) target = $region48
      $region47: #{tpu_custom_call.1} parent=5 // pred_region
        %s1017 = ssub.s32 %s16, 2
        // Predicated region
        $region49: #{tpu_custom_call.1} parent=47 // pred_check
          %p1018 = pneg %p113
        $region50: #{tpu_custom_call.1} parent=47 // pred_check_branch
          %1020 = sbr.rel (%p1018) target = $region52
        $region51: #{tpu_custom_call.1} parent=47 // pred_region
          %s1021 = sand.u32 %s98, 1
          %s1022 = scalar_lea.sflag [#allocation4], %s1021
          %s1023 = sand.u32 %s98, 1
          %s1024 = smul.addr %s1023, 256
          %s1025 = scalar_lea.vmem [#allocation7], %s1024
          %1027 = dma.done %s1022, 4096
        $region52: #{tpu_custom_call.1} parent=47 // pred_fallthru
          _
      $region48: #{tpu_custom_call.1} parent=5 // pred_fallthru
        _
    $region6: #{tpu_custom_call.1} parent=1 // loop_footer
      %s20 = sadd.s32 1, %s16
    $region7: #{tpu_custom_call.1} parent=1 // loop_footer_branch
      %15 = sbr.rel target = $region3
    $region8: #{tpu_custom_call.1} parent=1 // loop_exit
      _
    %1028 = vsyncpa [#allocation3], 1
    %s1029 = scalar_lea.sflag [#allocation3], 1
    %1030 = vsyncpa %s1029, 1
    %1031 = vsyncpa [#allocation6], 1
    %1032 = vsyncpa [#allocation4], 1
    %s1033 = scalar_lea.sflag [#allocation4], 1
    %1034 = vsyncpa %s1033, 1

</llo_original>
